<compile_context>
chip_gen: v7x
topology: tpu7x:2x2x1
jax: 0.10.0
libtpu: 0.0.40
codegen_flags: <defaults>
</compile_context>

<pallas_src>
import functools

import jax
import jax.numpy as jnp
from jax.experimental import pallas as pl
from jax.experimental.pallas import tpu as pltpu

_LANES = 128      # vreg lane width
_SUBLANES = 8     # vreg sublane count


def _round_up(x, m):
    return ((x + m - 1) // m) * m


def _logfilter_kernel(w_ref, x_ref, o_ref, *, K, S, TH, OWP, eps):
    """One (n, c) plane, one output row-tile per grid step.

    w_ref : SMEM (C*K*K,) f32   -- all depthwise taps as scalars
    x_ref : VMEM (1, 1, HP, WP) -- full spatially-padded plane for (n, c);
                                   block index is constant along the inner
                                   row-tile axis -> DMA'd once per (n, c)
    o_ref : VMEM (1, 1, TH, OWP) -- lane-dense output row tile
    """
    c = pl.program_id(1)
    h = pl.program_id(2)

    rows = (TH - 1) * S + K                            # strip rows this tile needs
    row0 = pl.multiple_of(h * (TH * S), _SUBLANES)     # TH % 8 == 0 -> aligned

    # log(x + eps) only on the strip -> bounded live range (no whole-plane lx).
    strip = x_ref[0, 0, pl.ds(row0, rows), :].astype(jnp.float32)
    lx = jnp.log(strip + eps)                          # EUP transcendental

    # Hoist the per-channel taps out of the MAC chain (cheap SMEM scalar reads).
    base = c * (K * K)
    taps = [w_ref[base + t] for t in range(K * K)]

    acc = jnp.zeros((TH, OWP), jnp.float32)
    # Depthwise conv = K*K shifted, scalar-weighted adds.  kh is a sublane
    # (address) offset; kw is a lane offset (XLU realignment, idle slot here).
    for kh in range(K):
        for kw in range(K):
            patch = lx[kh:kh + S * (TH - 1) + 1:S,
                       kw:kw + S * (OWP - 1) + 1:S]    # (TH, OWP)
            acc = acc + taps[kh * K + kw] * patch      # scalar-splat VPU MAC
    o_ref[0, 0] = (jnp.exp(acc) - eps).astype(o_ref.dtype)   # EUP transcendental


def log_filter(x, weight, *, kernel_size, stride=1, padding=0, eps=1e-6):
    """x: (N, C, H, W); weight: (C, K, K) depthwise filters (PyTorch (C,1,K,K) squeezed)."""
    N, C, H, W = x.shape
    K, S, P = kernel_size, stride, padding
    OH = (H + 2 * P - K) // S + 1
    OW = (W + 2 * P - K) // S + 1

    # ---- output tiling -----------------------------------------------------
    # Row tile: multiple of 8 sublanes, capped so (TH, OWP) tiles + their f32
    # temporaries stay in the ~1-4 MiB sweet spot.
    TH = min(_round_up(OH, _SUBLANES), 128)
    NH = pl.cdiv(OH, TH)
    OHP = NH * TH
    # Lane-dense stores: small widths rounded up to one full 128-lane vreg;
    # widths >= 128 stay natural (full-dim block, stores mostly unmasked).
    OWP = _LANES if OW < _LANES else OW

    # ---- input spatial padding (once, in HBM; no transposes anywhere) -------
    # Both the conv zero-padding and the row/lane alignment padding use the
    # value (1 - eps) so that log(pad + eps) == 0 inside the kernel.
    HP = max((OHP - 1) * S + K, H + 2 * P)
    WP = max((OWP - 1) * S + K, W + 2 * P)
    xp = jnp.pad(
        x,
        ((0, 0), (0, 0), (P, HP - H - P), (P, WP - W - P)),
        constant_values=1.0 - eps,
    )

    wf = weight.astype(jnp.float32).reshape(C * K * K)   # SMEM scalar taps

    kernel = functools.partial(_logfilter_kernel, K=K, S=S, TH=TH, OWP=OWP, eps=eps)

    # ---- explicit VMEM budget (v7x: 64 MiB physical per TensorCore) ---------
    xbytes = x.dtype.itemsize
    in_block = HP * WP * xbytes
    out_block = TH * OWP * xbytes
    strip_f32 = ((TH - 1) * S + K) * WP * 4
    vmem_limit = int(min(64 << 20,
                         max(24 << 20,
                             2 * in_block + 2 * out_block + 4 * strip_f32 + (2 << 20))))

    cost = pl.CostEstimate(
        flops=int(N * C * OHP * OWP * 2 * K * K),
        transcendentals=int(N * C * (NH * ((TH - 1) * S + K) * WP + OHP * OWP)),
        bytes_accessed=int(xbytes * N * C * (HP * WP + OHP * OWP) + 4 * C * K * K),
    )

    out = pl.pallas_call(
        kernel,
        out_shape=jax.ShapeDtypeStruct((N, C, OHP, OWP), x.dtype),
        grid_spec=pltpu.PrefetchScalarGridSpec(
            num_scalar_prefetch=0,
            # N, C outer ("parallel": independent planes -> megacore work);
            # row tiles innermost so the input plane's block index is constant
            # along the inner axis and Pallas loads it once per (n, c).
            grid=(N, C, NH),
            in_specs=[
                pl.BlockSpec(memory_space=pltpu.MemorySpace.SMEM),        # taps
                pl.BlockSpec((1, 1, HP, WP), lambda n, c, h: (n, c, 0, 0)),
            ],
            out_specs=pl.BlockSpec((1, 1, TH, OWP), lambda n, c, h: (n, c, h, 0)),
        ),
        compiler_params=pltpu.CompilerParams(
            dimension_semantics=("parallel", "parallel", "arbitrary"),
            vmem_limit_bytes=vmem_limit,
        ),
        cost_estimate=cost,
    )(wf, xp)

    # Drop row / lane alignment padding (no layout transposes needed).
    return out[:, :, :OH, :OW]


def log_filter_ref(x, weight, *, kernel_size, stride=1, padding=0, eps=1e-6):
    """Pure-JAX reference (lax.conv with feature_group_count)."""
    lx = jnp.log(x + eps)
    C = x.shape[1]
    w = weight.reshape(C, 1, kernel_size, kernel_size)  # (O, I/groups, K, K)
    y = jax.lax.conv_general_dilated(
        lx, w,
        window_strides=(stride, stride),
        padding=[(padding, padding), (padding, padding)],
        dimension_numbers=("NCHW", "OIHW", "NCHW"),
        feature_group_count=C,
    )
    return jnp.exp(y) - eps


if __name__ == "__main__":
    # Small deterministic example: batch=2, dim=4, spatial=16, kernel_size=3.
    N, C, H, W = 2, 4, 16, 16
    K, S, P = 3, 1, 0

    key = jax.random.PRNGKey(0)
    kx, kw = jax.random.split(key)
    # positive input so log is well-defined
    x = jax.random.uniform(kx, (N, C, H, W), jnp.float32, minval=0.05, maxval=1.0)
    # deterministic depthwise weights, PyTorch shape (C, 1, K, K) squeezed -> (C, K, K)
    fan_in = 1 * K * K
    bound = 1.0 / (fan_in ** 0.5)
    weight = jax.random.uniform(kw, (C, K, K), jnp.float32, minval=-bound, maxval=bound)

    out = jax.block_until_ready(log_filter(x, weight, kernel_size=K, stride=S, padding=P))
    ref = log_filter_ref(x, weight, kernel_size=K, stride=S, padding=P)
    assert out.shape == (N, C, (H - K) // S + 1, (W - K) // S + 1), out.shape
    assert jnp.allclose(out, ref, atol=1e-4, rtol=1e-4), "mismatch vs reference (P=0)"

    # also exercise the conv-padding path
    out_p = jax.block_until_ready(log_filter(x, weight, kernel_size=K, stride=S, padding=1))
    ref_p = log_filter_ref(x, weight, kernel_size=K, stride=S, padding=1)
    assert jnp.allclose(out_p, ref_p, atol=1e-4, rtol=1e-4), "mismatch vs reference (P=1)"

    print("KERNEL_OK")
</pallas_src>

<mosaic_0001>
module attributes {stable_mosaic.version = 11 : i64} {
  func.func @_logfilter_kernel(%arg0: i32, %arg1: i32, %arg2: i32, %arg3: memref<36xf32, #tpu.memory_space<smem>>, %arg4: memref<1x1x18x130xf32, #tpu.memory_space<vmem>>, %arg5: memref<1x1x16x128xf32, #tpu.memory_space<vmem>>) attributes {dimension_semantics = [#tpu.dimension_semantics<parallel>, #tpu.dimension_semantics<parallel>, #tpu.dimension_semantics<arbitrary>], iteration_bounds = array<i64: 2, 4, 1>, scalar_prefetch = 0 : i64, scratch_operands = 0 : i64, tpu.core_type = #tpu.core_type<tc>, window_params = [{transform_indices = @transform_0, window_bounds = array<i64: 36>}, {transform_indices = @transform_1, window_bounds = array<i64: 1, 1, 18, 130>}, {transform_indices = @transform_2, window_bounds = array<i64: 1, 1, 16, 128>}]} {
    %c16_i32 = arith.constant 16 : i32
    %0 = arith.muli %arg2, %c16_i32 : i32
    %1 = tpu.assume_multiple %0, 8 : i32
    %c0 = arith.constant 0 : index
    %c0_0 = arith.constant 0 : index
    %2 = arith.index_cast %1 : i32 to index
    %c0_1 = arith.constant 0 : index
    %3 = vector.load %arg4[%c0, %c0_0, %2, %c0_1] : memref<1x1x18x130xf32, #tpu.memory_space<vmem>>, vector<1x1x18x130xf32>
    %4 = vector.shape_cast %3 : vector<1x1x18x130xf32> to vector<18x130xf32>
    %cst = arith.constant 9.99999997E-7 : f32
    %5 = vector.broadcast %cst : f32 to vector<18x130xf32>
    %6 = arith.addf %4, %5 : vector<18x130xf32>
    %7 = math.log %6 : vector<18x130xf32>
    %c9_i32 = arith.constant 9 : i32
    %8 = arith.muli %arg1, %c9_i32 : i32
    %c0_i32 = arith.constant 0 : i32
    %9 = arith.addi %8, %c0_i32 : i32
    %10 = arith.index_cast %9 : i32 to index
    %11 = memref.load %arg3[%10] : memref<36xf32, #tpu.memory_space<smem>>
    %c1_i32 = arith.constant 1 : i32
    %12 = arith.addi %8, %c1_i32 : i32
    %13 = arith.index_cast %12 : i32 to index
    %14 = memref.load %arg3[%13] : memref<36xf32, #tpu.memory_space<smem>>
    %c2_i32 = arith.constant 2 : i32
    %15 = arith.addi %8, %c2_i32 : i32
    %16 = arith.index_cast %15 : i32 to index
    %17 = memref.load %arg3[%16] : memref<36xf32, #tpu.memory_space<smem>>
    %c3_i32 = arith.constant 3 : i32
    %18 = arith.addi %8, %c3_i32 : i32
    %19 = arith.index_cast %18 : i32 to index
    %20 = memref.load %arg3[%19] : memref<36xf32, #tpu.memory_space<smem>>
    %c4_i32 = arith.constant 4 : i32
    %21 = arith.addi %8, %c4_i32 : i32
    %22 = arith.index_cast %21 : i32 to index
    %23 = memref.load %arg3[%22] : memref<36xf32, #tpu.memory_space<smem>>
    %c5_i32 = arith.constant 5 : i32
    %24 = arith.addi %8, %c5_i32 : i32
    %25 = arith.index_cast %24 : i32 to index
    %26 = memref.load %arg3[%25] : memref<36xf32, #tpu.memory_space<smem>>
    %c6_i32 = arith.constant 6 : i32
    %27 = arith.addi %8, %c6_i32 : i32
    %28 = arith.index_cast %27 : i32 to index
    %29 = memref.load %arg3[%28] : memref<36xf32, #tpu.memory_space<smem>>
    %c7_i32 = arith.constant 7 : i32
    %30 = arith.addi %8, %c7_i32 : i32
    %31 = arith.index_cast %30 : i32 to index
    %32 = memref.load %arg3[%31] : memref<36xf32, #tpu.memory_space<smem>>
    %c8_i32 = arith.constant 8 : i32
    %33 = arith.addi %8, %c8_i32 : i32
    %34 = arith.index_cast %33 : i32 to index
    %35 = memref.load %arg3[%34] : memref<36xf32, #tpu.memory_space<smem>>
    %cst_2 = arith.constant 0.000000e+00 : f32
    %36 = vector.broadcast %cst_2 : f32 to vector<16x128xf32>
    %37 = vector.extract_strided_slice %7 {offsets = [0, 0], sizes = [16, 128], strides = [1, 1]} : vector<18x130xf32> to vector<16x128xf32>
    %38 = vector.broadcast %11 : f32 to vector<16x128xf32>
    %39 = arith.mulf %38, %37 : vector<16x128xf32>
    %40 = arith.addf %36, %39 : vector<16x128xf32>
    %41 = vector.extract_strided_slice %7 {offsets = [0, 1], sizes = [16, 128], strides = [1, 1]} : vector<18x130xf32> to vector<16x128xf32>
    %42 = vector.broadcast %14 : f32 to vector<16x128xf32>
    %43 = arith.mulf %42, %41 : vector<16x128xf32>
    %44 = arith.addf %40, %43 : vector<16x128xf32>
    %45 = vector.extract_strided_slice %7 {offsets = [0, 2], sizes = [16, 128], strides = [1, 1]} : vector<18x130xf32> to vector<16x128xf32>
    %46 = vector.broadcast %17 : f32 to vector<16x128xf32>
    %47 = arith.mulf %46, %45 : vector<16x128xf32>
    %48 = arith.addf %44, %47 : vector<16x128xf32>
    %49 = vector.extract_strided_slice %7 {offsets = [1, 0], sizes = [16, 128], strides = [1, 1]} : vector<18x130xf32> to vector<16x128xf32>
    %50 = vector.broadcast %20 : f32 to vector<16x128xf32>
    %51 = arith.mulf %50, %49 : vector<16x128xf32>
    %52 = arith.addf %48, %51 : vector<16x128xf32>
    %53 = vector.extract_strided_slice %7 {offsets = [1, 1], sizes = [16, 128], strides = [1, 1]} : vector<18x130xf32> to vector<16x128xf32>
    %54 = vector.broadcast %23 : f32 to vector<16x128xf32>
    %55 = arith.mulf %54, %53 : vector<16x128xf32>
    %56 = arith.addf %52, %55 : vector<16x128xf32>
    %57 = vector.extract_strided_slice %7 {offsets = [1, 2], sizes = [16, 128], strides = [1, 1]} : vector<18x130xf32> to vector<16x128xf32>
    %58 = vector.broadcast %26 : f32 to vector<16x128xf32>
    %59 = arith.mulf %58, %57 : vector<16x128xf32>
    %60 = arith.addf %56, %59 : vector<16x128xf32>
    %61 = vector.extract_strided_slice %7 {offsets = [2, 0], sizes = [16, 128], strides = [1, 1]} : vector<18x130xf32> to vector<16x128xf32>
    %62 = vector.broadcast %29 : f32 to vector<16x128xf32>
    %63 = arith.mulf %62, %61 : vector<16x128xf32>
    %64 = arith.addf %60, %63 : vector<16x128xf32>
    %65 = vector.extract_strided_slice %7 {offsets = [2, 1], sizes = [16, 128], strides = [1, 1]} : vector<18x130xf32> to vector<16x128xf32>
    %66 = vector.broadcast %32 : f32 to vector<16x128xf32>
    %67 = arith.mulf %66, %65 : vector<16x128xf32>
    %68 = arith.addf %64, %67 : vector<16x128xf32>
    %69 = vector.extract_strided_slice %7 {offsets = [2, 2], sizes = [16, 128], strides = [1, 1]} : vector<18x130xf32> to vector<16x128xf32>
    %70 = vector.broadcast %35 : f32 to vector<16x128xf32>
    %71 = arith.mulf %70, %69 : vector<16x128xf32>
    %72 = arith.addf %68, %71 : vector<16x128xf32>
    %73 = math.exp %72 : vector<16x128xf32>
    %cst_3 = arith.constant 9.99999997E-7 : f32
    %74 = vector.broadcast %cst_3 : f32 to vector<16x128xf32>
    %75 = arith.subf %73, %74 : vector<16x128xf32>
    %c0_4 = arith.constant 0 : index
    %c0_5 = arith.constant 0 : index
    %c0_6 = arith.constant 0 : index
    %c0_7 = arith.constant 0 : index
    %76 = vector.load %arg5[%c0_4, %c0_5, %c0_6, %c0_7] : memref<1x1x16x128xf32, #tpu.memory_space<vmem>>, vector<1x1x16x128xf32>
    %77 = vector.shape_cast %76 : vector<1x1x16x128xf32> to vector<16x128xf32>
    %78 = vector.shape_cast %75 : vector<16x128xf32> to vector<1x1x16x128xf32>
    tpu.vector_store %arg5[%c0_4, %c0_5, %c0_6, %c0_7], %78 {strides = array<i32>} : memref<1x1x16x128xf32, #tpu.memory_space<vmem>>, vector<1x1x16x128xf32>,
    return
  }
  func.func @transform_0(%arg0: i32, %arg1: i32, %arg2: i32) -> i32 {
    %c0_i32 = arith.constant 0 : i32
    %c0_i32_0 = arith.constant 0 : i32
    return %c0_i32 : i32
  }
  func.func @transform_1(%arg0: i32, %arg1: i32, %arg2: i32) -> (i32, i32, i32, i32) {
    %c0_i32 = arith.constant 0 : i32
    %c0_i32_0 = arith.constant 0 : i32
    %c0_i32_1 = arith.constant 0 : i32
    return %arg0, %arg1, %c0_i32, %c0_i32_0 : i32, i32, i32, i32
  }
  func.func @transform_2(%arg0: i32, %arg1: i32, %arg2: i32) -> (i32, i32, i32, i32) {
    %c0_i32 = arith.constant 0 : i32
    %c0_i32_0 = arith.constant 0 : i32
    return %arg0, %arg1, %arg2, %c0_i32 : i32, i32, i32, i32
  }
}

</mosaic_0001>

<llo_original>
// kernel: tpu_custom_call.1
$region0: #{tpu_custom_call.1}
  #allocation0 [shape = 'u32[]', space=smem, size = 0x4, offset = 0x4, fixed_abs, tag = 'smem constant byte address 0x4 - core index']
  #allocation1 [shape = 'u32[144,128]{1,0:T(1,128)}', space=vmem, size = 0x12000, scoped, tag = 'internal scratch']
  %s0 = inlined_call_operand.vmem [shape: f32[36], index: 0, kind: input, shape index: {}]
  %s1 = inlined_call_operand.vmem [shape: f32[2,4,18,130], index: 1, kind: input, shape index: {}]
  %s2 = inlined_call_operand.hbm [shape: f32[2,4,16,128], index: 2, kind: output, shape index: {}]
  %s3 = sld [smem:[#allocation0]]
  $region45: #{tpu_custom_call.1} parent=0
    _
  %s5 = ssub.s32 1, %s3
  %s6 = scalar_select 0, %s5, %s3
  $region1: #{tpu_custom_call.1} parent=0
    #allocation2 [shape = 'u8[512]{0}', space=smem, size = 0x200, scoped, tag = 'input window, operand 0, single buffered']
    #allocation3 [shape = 's32[2]{0}', space=sflag, size = 0x8, scoped, tag = 'scoped memory for tpu_custom_call.1']
    #allocation4 [shape = 's32[2]{0}', space=sflag, size = 0x8, scoped, tag = 'scoped memory for tpu_custom_call.1']
    #allocation5 [shape = 'u8[16384]{0}', space=vmem, size = 0x4000, scoped, tag = 'output window, operand 0']
    %7 = vsyncpa [#allocation4], 0
    %8 = vsyncpa [#allocation3], 0
    %s9 = scalar_lea.sflag [#allocation3], 1
    %10 = vsyncpa %s9, 0
    loop: start=0, step=1, limit=10
    $region2: #{tpu_custom_call.1} parent=1 // loop_pre_header
      _
    $region3: #{tpu_custom_call.1} parent=1 // loop_header
      %s12 = sphi 0, %s16
      %p13 = scmp.ge.s32.totalorder %s12, 10
      %s19 = sphi 0, %s38
      %s20 = sphi 0, %s34
      %s21 = sphi 0, %s30
      %s22 = sphi 0, %s19
      %s23 = sphi 0, %s20
      %s24 = sphi 0, %s21
      %s25 = sphi 0, %s22
      %s26 = sphi 0, %s23
      %s27 = sphi 0, %s24
      %s39 = sphi 0, %s39
      %s41 = sphi 0, %s39
      %s42 = sphi 0, %s41
      %s56 = sphi 0, %s42
      %s64 = sphi 0, %s66
      %s67 = sphi 0, %s64
      %s68 = sphi 0, %s67
      %s84 = sphi 0, %s68
      %s94 = sphi 0, %s96
      %s97 = sphi 0, %s94
      %s98 = sphi 0, %s97
      %s114 = sphi 0, %s98
    $region4: #{tpu_custom_call.1} parent=1 // loop_header_branch
      %15 = sbr.rel (%p13) target = $region8
    $region5: #{tpu_custom_call.1} parent=1 // loop_body
      %s17 = ssub.s32 %s12, 1
      %s18 = ssub.s32 %s12, 2
      %s28 = sadd.s32 1, %s21
      %p29 = scmp.ge.s32.totalorder %s28, 1
      %s30 = scalar_select %p29, 0, %s28
      %s31 = sadd.s32 1, %s20
      %s32 = scalar_select %p29, %s31, %s20
      %p33 = scmp.ge.s32.totalorder %s32, 4
      %s34 = scalar_select %p33, 0, %s32
      %s35 = sadd.s32 1, %s19
      %s36 = scalar_select %p33, %s35, %s19
      %p37 = scmp.ge.s32.totalorder %s36, 2
      %s38 = scalar_select %p37, 0, %s36
      %s40 = sadd.s32 %s39, 1
      %p43 = scmp.eq.s32.totalorder %s12, 7
      %p44 = scmp.ne.s32.totalorder %s39, %s41
      %p45 = scmp.eq.s32.totalorder %s12, 0
      %p46 = por %p44, %p45
      %p47 = scmp.ne.s32.totalorder %s39, %s41
      %p48 = scmp.eq.s32.totalorder %s17, 7
      %p49 = por %p47, %p48
      %p50 = scmp.ne.s32.totalorder %s41, %s42
      %p51 = scmp.eq.s32.totalorder %s17, 0
      %p52 = por %p50, %p51
      %p53 = scmp.ne.s32.totalorder %s41, %s42
      %p54 = scmp.eq.s32.totalorder %s18, 7
      %p55 = por %p53, %p54
      %p57 = scmp.ne.s32.totalorder %s42, %s56
      %p58 = scmp.eq.s32.totalorder %s18, 0
      %p59 = por %p57, %p58
      %s60 = ssub.s32 %s19, %s38
      %s61 = ssub.s32 %s20, %s34
      %s62 = sor.u32 %s60, %s61
      %p63 = scmp.eq.s32.totalorder %s62, 0
      %s65 = sadd.s32 %s64, 1
      %s66 = scalar_select %p63, %s64, %s65
      %p69 = pneg %p63
      %p70 = scmp.eq.s32.totalorder %s12, 7
      %p71 = por %p69, %p70
      %p72 = scmp.ne.s32.totalorder %s64, %s67
      %p73 = scmp.eq.s32.totalorder %s12, 0
      %p74 = por %p72, %p73
      %p75 = scmp.ne.s32.totalorder %s64, %s67
      %p76 = scmp.eq.s32.totalorder %s17, 7
      %p77 = por %p75, %p76
      %p78 = scmp.ne.s32.totalorder %s67, %s68
      %p79 = scmp.eq.s32.totalorder %s17, 0
      %p80 = por %p78, %p79
      %p81 = scmp.ne.s32.totalorder %s67, %s68
      %p82 = scmp.eq.s32.totalorder %s18, 7
      %p83 = por %p81, %p82
      %p85 = scmp.ne.s32.totalorder %s68, %s84
      %p86 = scmp.eq.s32.totalorder %s18, 0
      %p87 = por %p85, %p86
      %s88 = ssub.s32 %s19, %s38
      %s89 = ssub.s32 %s20, %s34
      %s90 = sor.u32 %s88, %s89
      %s91 = ssub.s32 %s21, %s30
      %s92 = sor.u32 %s90, %s91
      %p93 = scmp.eq.s32.totalorder %s92, 0
      %s95 = sadd.s32 %s94, 1
      %s96 = scalar_select %p93, %s94, %s95
      %p99 = pneg %p93
      %p100 = scmp.eq.s32.totalorder %s12, 7
      %p101 = por %p99, %p100
      %p102 = scmp.ne.s32.totalorder %s94, %s97
      %p103 = scmp.eq.s32.totalorder %s12, 0
      %p104 = por %p102, %p103
      %p105 = scmp.ne.s32.totalorder %s94, %s97
      %p106 = scmp.eq.s32.totalorder %s17, 7
      %p107 = por %p105, %p106
      %p108 = scmp.ne.s32.totalorder %s97, %s98
      %p109 = scmp.eq.s32.totalorder %s17, 0
      %p110 = por %p108, %p109
      %p111 = scmp.ne.s32.totalorder %s97, %s98
      %p112 = scmp.eq.s32.totalorder %s18, 7
      %p113 = por %p111, %p112
      %p115 = scmp.ne.s32.totalorder %s98, %s114
      %p116 = scmp.eq.s32.totalorder %s18, 0
      %p117 = por %p115, %p116
      %p118 = scmp.le.s32.totalorder 1, %s12
      %p119 = scmp.lt.s32.totalorder %s12, 9
      %p120 = pnand %p118, %p119
      %p121 = pneg %p120
      // Predicated region
      $region9: #{tpu_custom_call.1} parent=5 // pred_check
        _
      $region10: #{tpu_custom_call.1} parent=5 // pred_check_branch
        %123 = sbr.rel (%p120) target = $region12
      $region11: #{tpu_custom_call.1} parent=5 // pred_region
        %s124 = ssub.s32 %s12, 1
        // Predicated region
        $region13: #{tpu_custom_call.1} parent=11 // pred_check
          %p125 = pneg %p52
        $region14: #{tpu_custom_call.1} parent=11 // pred_check_branch
          %127 = sbr.rel (%p125) target = $region16
        $region15: #{tpu_custom_call.1} parent=11 // pred_region
          %s129 = ssub.s32 16, 16
          %130 = vsyncadd [#allocation4], %s129
          %s132 = sshll.u32 %s0, 4
          %s133 = int_to_ptr.vmem [resolvable:$true] %s132
          %135 = dma.vmem_to_smem %s133, 16, [#allocation2], [#allocation4]
        $region16: #{tpu_custom_call.1} parent=11 // pred_fallthru
          _
      $region12: #{tpu_custom_call.1} parent=5 // pred_fallthru
        _
      %p136 = scmp.lt.s32.totalorder %s12, 8
      // Predicated region
      $region17: #{tpu_custom_call.1} parent=5 // pred_check
        %p137 = pneg %p136
      $region18: #{tpu_custom_call.1} parent=5 // pred_check_branch
        %139 = sbr.rel (%p137) target = $region20
      $region19: #{tpu_custom_call.1} parent=5 // pred_region
        // Predicated region
        $region21: #{tpu_custom_call.1} parent=19 // pred_check
          %p140 = pneg %p74
        $region22: #{tpu_custom_call.1} parent=19 // pred_check_branch
          %142 = sbr.rel (%p140) target = $region24
        $region23: #{tpu_custom_call.1} parent=19 // pred_region
          %p143 = scmp.lt.s32.totalorder %s19, 1
          %s144 = scalar_select %p143, %s19, 1
          %p145 = scmp.lt.s32.totalorder %s20, 3
          %s146 = scalar_select %p145, %s20, 3
          %s147 = smul.addr %s146, 6
          %s148 = smul.addr %s144, 24
          %s149 = sadd.s32 %s147, %s148
          %s150 = smul.addr %s149, 8
          %s151 = scalar_lea.vmem %s1, %s150
        $region24: #{tpu_custom_call.1} parent=19 // pred_fallthru
          _
      $region20: #{tpu_custom_call.1} parent=5 // pred_fallthru
        _
      %p152 = scmp.le.s32.totalorder 1, %s12
      %p153 = scmp.lt.s32.totalorder %s12, 9
      %p154 = pnand %p152, %p153
      %p155 = pneg %p154
      // Predicated region
      $region25: #{tpu_custom_call.1} parent=5 // pred_check
        _
      $region26: #{tpu_custom_call.1} parent=5 // pred_check_branch
        %157 = sbr.rel (%p154) target = $region28
      $region27: #{tpu_custom_call.1} parent=5 // pred_region
        %s158 = ssub.s32 %s12, 1
        // Predicated region
        $region29: #{tpu_custom_call.1} parent=27 // pred_check
          %p159 = pneg %p52
        $region30: #{tpu_custom_call.1} parent=27 // pred_check_branch
          %161 = sbr.rel (%p159) target = $region32
        $region31: #{tpu_custom_call.1} parent=27 // pred_region
          %162 = dma.done [#allocation4], 16
        $region32: #{tpu_custom_call.1} parent=27 // pred_fallthru
          _
        %163 = sfence
        %p164 = pneg %p52
        %p165 = pneg %p49
        %p166 = scmp.lt.s32.totalorder %s22, 1
        %s167 = scalar_select %p166, %s22, 1
        %p168 = scmp.lt.s32.totalorder %s23, 3
        %s169 = scalar_select %p168, %s23, 3
        %s170 = smul.addr %s169, 6
        %s171 = smul.addr %s167, 24
        %s172 = sadd.s32 %s170, %s171
        %s173 = smul.addr %s172, 8
        %s174 = scalar_lea.vmem %s1, %s173
        %p175 = pneg %p80
        %p176 = pneg %p77
        %p177 = pneg %p110
        %p178 = pneg %p107
        %s179 = sand.u32 %s97, 1
        %s180 = scalar_lea.sflag [#allocation3], %s179
        %s181 = sand.u32 %s97, 1
        %s182 = smul.addr %s181, 16
        %s183 = scalar_lea.vmem [#allocation5], %s182
        %p184 = scmp.lt.s32.totalorder %s22, 1
        %s185 = scalar_select %p184, %s22, 1
        %p186 = scmp.lt.s32.totalorder %s23, 3
        %s187 = scalar_select %p186, %s23, 3
        %s188 = smul.addr %s187, 6
        %s189 = smul.addr %s185, 24
        %s190 = sadd.s32 %s188, %s189
        %s191 = smul.addr %s190, 8
        %s192 = scalar_lea.vmem %s1, %s191
        %s193 = smul.u32 2, %s24
        %s194 = smul.u32 %s24, 16
        %s195 = sshra.s32 %s194, 3
        %s196 = sand.u32 %s194, 7
        %s197 = smul.u32 %s195, 2
        %s198 = smul.addr %s197, 8
        %s199 = scalar_lea.vmem %s192, %s198
        %v200 = vld [vmem:[%s199] sm:$0xff]
        %v201 = vld [vmem:[%s199 + $0x8] sm:$0xff]
        %v202 = vld [vmem:[%s199 + $0x10] sm:$0xff]
        %v203 = vld [vmem:[%s199 + $0x18] sm:$0xff]
        %v204 = vld [vmem:[%s199 + $0x20] sm:$0x3]
        %v205 = vld [vmem:[%s199 + $0x28] sm:$0x3]
        %v206 = vadd.f32 %v200, 1e-06
        %v207 = vadd.f32 %v201, 1e-06
        %v208 = vadd.f32 %v202, 1e-06
        %v209 = vadd.f32 %v203, 1e-06
        %v210 = vadd.f32 %v204, 1e-06
        %v211 = vadd.f32 %v205, 1e-06
        %v212 = vlog2.pop %v206
        %v213 = vmul.f32 %v212, 0.6931472
        %v214 = vlog2.pop %v207
        %v215 = vmul.f32 %v214, 0.6931472
        %v216 = vlog2.pop %v208
        %v217 = vmul.f32 %v216, 0.6931472
        %v218 = vlog2.pop %v209
        %v219 = vmul.f32 %v218, 0.6931472
        %v220 = vlog2.pop %v210
        %v221 = vmul.f32 %v220, 0.6931472
        %v222 = vlog2.pop %v211
        %v223 = vmul.f32 %v222, 0.6931472
        %s224 = smul.u32 %s23, 9
        %s225 = sld [smem:[#allocation2 + %s224]]
        %s226 = sadd.s32 %s224, 1
        %s227 = sld [smem:[#allocation2 + %s226]]
        %s228 = sadd.s32 %s224, 2
        %s229 = sld [smem:[#allocation2 + %s228]]
        %s230 = sadd.s32 %s224, 3
        %s231 = sld [smem:[#allocation2 + %s230]]
        %s232 = sadd.s32 %s224, 4
        %s233 = sld [smem:[#allocation2 + %s232]]
        %s234 = sadd.s32 %s224, 5
        %s235 = sld [smem:[#allocation2 + %s234]]
        %s236 = sadd.s32 %s224, 6
        %s237 = sld [smem:[#allocation2 + %s236]]
        %s238 = sadd.s32 %s224, 7
        %s239 = sld [smem:[#allocation2 + %s238]]
        %s240 = sadd.s32 %s224, 8
        %s241 = sld [smem:[#allocation2 + %s240]]
        %v242 = vstv %s225
        %v243 = vmul.f32 %v242, %v213
        %v244 = vmul.f32 %v242, %v217
        %v245 = vadd.f32 %v243, 0.0
        %v246 = vadd.f32 %v244, 0.0
        %v247 = vstv %s227
        %v248 = vmul.f32 %v247, %v213
        %v249 = vmul.f32 %v247, %v215
        %v250 = vmul.f32 %v247, %v217
        %v251 = vmul.f32 %v247, %v219
        %256 = vrot.lane.b32.xlu0 %v248, 127
        %v257 = vpop.permute.xlu0 %256
        %258 = vrot.lane.b32.xlu0 %v249, 127
        %v259 = vpop.permute.xlu0 %258
        %260 = vrot.lane.b32.xlu0 %v250, 127
        %v261 = vpop.permute.xlu0 %260
        %262 = vrot.lane.b32.xlu0 %v251, 127
        %v263 = vpop.permute.xlu0 %262
        %vm264 = vcmask 1039360
        %v265 = vsel %vm264, %v257, %v259
        %v266 = vsel %vm264, %v261, %v263
        %v269 = vadd.f32 %v245, %v265
        %v270 = vadd.f32 %v246, %v266
        %v271 = vstv %s229
        %v272 = vmul.f32 %v271, %v213
        %v273 = vmul.f32 %v271, %v215
        %v274 = vmul.f32 %v271, %v217
        %v275 = vmul.f32 %v271, %v219
        %280 = vrot.lane.b32.xlu0 %v272, 126
        %v281 = vpop.permute.xlu0 %280
        %282 = vrot.lane.b32.xlu0 %v273, 126
        %v283 = vpop.permute.xlu0 %282
        %284 = vrot.lane.b32.xlu0 %v274, 126
        %v285 = vpop.permute.xlu0 %284
        %286 = vrot.lane.b32.xlu0 %v275, 126
        %v287 = vpop.permute.xlu0 %286
        %vm288 = vcmask 1031168
        %v289 = vsel %vm288, %v281, %v283
        %v290 = vsel %vm288, %v285, %v287
        %v293 = vadd.f32 %v269, %v289
        %v294 = vadd.f32 %v270, %v290
        %v295 = vstv %s231
        %v296 = vmul.f32 %v295, %v213
        %v297 = vmul.f32 %v295, %v217
        %v298 = vmul.f32 %v295, %v221
        %vm302 = vcmask 1046528
        %v303 = vrot.slane %v296, 1
        %v304 = vrot.slane %v297, 1
        %v305 = vsel %vm302, %v303, %v304
        %v306 = vrot.slane %v298, 1
        %v307 = vsel %vm302, %v304, %v306
        %v310 = vadd.f32 %v293, %v305
        %v311 = vadd.f32 %v294, %v307
        %v312 = vstv %s233
        %v313 = vmul.f32 %v312, %v213
        %v314 = vmul.f32 %v312, %v215
        %v315 = vmul.f32 %v312, %v217
        %v316 = vmul.f32 %v312, %v219
        %v317 = vmul.f32 %v312, %v221
        %v318 = vmul.f32 %v312, %v223
        %v325 = vrot.slane %v313, 1
        %v326 = vrot.slane %v315, 1
        %v327 = vsel %vm302, %v325, %v326
        %v328 = vrot.slane %v314, 1
        %v329 = vrot.slane %v316, 1
        %v330 = vsel %vm302, %v328, %v329
        %v331 = vrot.slane %v317, 1
        %v332 = vsel %vm302, %v326, %v331
        %v333 = vrot.slane %v318, 1
        %v334 = vsel %vm302, %v329, %v333
        %335 = vrot.lane.b32.xlu0 %v327, 127
        %v336 = vpop.permute.xlu0 %335
        %337 = vrot.lane.b32.xlu0 %v330, 127
        %v338 = vpop.permute.xlu0 %337
        %339 = vrot.lane.b32.xlu0 %v332, 127
        %v340 = vpop.permute.xlu0 %339
        %341 = vrot.lane.b32.xlu0 %v334, 127
        %v342 = vpop.permute.xlu0 %341
        %v343 = vsel %vm264, %v336, %v338
        %v344 = vsel %vm264, %v340, %v342
        %v347 = vadd.f32 %v310, %v343
        %v348 = vadd.f32 %v311, %v344
        %v349 = vstv %s235
        %v350 = vmul.f32 %v349, %v213
        %v351 = vmul.f32 %v349, %v215
        %v352 = vmul.f32 %v349, %v217
        %v353 = vmul.f32 %v349, %v219
        %v354 = vmul.f32 %v349, %v221
        %v355 = vmul.f32 %v349, %v223
        %v362 = vrot.slane %v350, 1
        %v363 = vrot.slane %v352, 1
        %v364 = vsel %vm302, %v362, %v363
        %v365 = vrot.slane %v351, 1
        %v366 = vrot.slane %v353, 1
        %v367 = vsel %vm302, %v365, %v366
        %v368 = vrot.slane %v354, 1
        %v369 = vsel %vm302, %v363, %v368
        %v370 = vrot.slane %v355, 1
        %v371 = vsel %vm302, %v366, %v370
        %372 = vrot.lane.b32.xlu0 %v364, 126
        %v373 = vpop.permute.xlu0 %372
        %374 = vrot.lane.b32.xlu0 %v367, 126
        %v375 = vpop.permute.xlu0 %374
        %376 = vrot.lane.b32.xlu0 %v369, 126
        %v377 = vpop.permute.xlu0 %376
        %378 = vrot.lane.b32.xlu0 %v371, 126
        %v379 = vpop.permute.xlu0 %378
        %v380 = vsel %vm288, %v373, %v375
        %v381 = vsel %vm288, %v377, %v379
        %v384 = vadd.f32 %v347, %v380
        %v385 = vadd.f32 %v348, %v381
        %v386 = vstv %s237
        %v387 = vmul.f32 %v386, %v213
        %v388 = vmul.f32 %v386, %v217
        %v389 = vmul.f32 %v386, %v221
        %vm393 = vcmask 1045504
        %v394 = vrot.slane %v387, 2
        %v395 = vrot.slane %v388, 2
        %v396 = vsel %vm393, %v394, %v395
        %v397 = vrot.slane %v389, 2
        %v398 = vsel %vm393, %v395, %v397
        %v401 = vadd.f32 %v384, %v396
        %v402 = vadd.f32 %v385, %v398
        %v403 = vstv %s239
        %v404 = vmul.f32 %v403, %v213
        %v405 = vmul.f32 %v403, %v215
        %v406 = vmul.f32 %v403, %v217
        %v407 = vmul.f32 %v403, %v219
        %v408 = vmul.f32 %v403, %v221
        %v409 = vmul.f32 %v403, %v223
        %v416 = vrot.slane %v404, 2
        %v417 = vrot.slane %v406, 2
        %v418 = vsel %vm393, %v416, %v417
        %v419 = vrot.slane %v405, 2
        %v420 = vrot.slane %v407, 2
        %v421 = vsel %vm393, %v419, %v420
        %v422 = vrot.slane %v408, 2
        %v423 = vsel %vm393, %v417, %v422
        %v424 = vrot.slane %v409, 2
        %v425 = vsel %vm393, %v420, %v424
        %426 = vrot.lane.b32.xlu0 %v418, 127
        %v427 = vpop.permute.xlu0 %426
        %428 = vrot.lane.b32.xlu0 %v421, 127
        %v429 = vpop.permute.xlu0 %428
        %430 = vrot.lane.b32.xlu0 %v423, 127
        %v431 = vpop.permute.xlu0 %430
        %432 = vrot.lane.b32.xlu0 %v425, 127
        %v433 = vpop.permute.xlu0 %432
        %v434 = vsel %vm264, %v427, %v429
        %v435 = vsel %vm264, %v431, %v433
        %v438 = vadd.f32 %v401, %v434
        %v439 = vadd.f32 %v402, %v435
        %v440 = vstv %s241
        %v441 = vmul.f32 %v440, %v213
        %v442 = vmul.f32 %v440, %v215
        %v443 = vmul.f32 %v440, %v217
        %v444 = vmul.f32 %v440, %v219
        %v445 = vmul.f32 %v440, %v221
        %v446 = vmul.f32 %v440, %v223
        %v453 = vrot.slane %v441, 2
        %v454 = vrot.slane %v443, 2
        %v455 = vsel %vm393, %v453, %v454
        %v456 = vrot.slane %v442, 2
        %v457 = vrot.slane %v444, 2
        %v458 = vsel %vm393, %v456, %v457
        %v459 = vrot.slane %v445, 2
        %v460 = vsel %vm393, %v454, %v459
        %v461 = vrot.slane %v446, 2
        %v462 = vsel %vm393, %v457, %v461
        %463 = vrot.lane.b32.xlu0 %v455, 126
        %v464 = vpop.permute.xlu0 %463
        %465 = vrot.lane.b32.xlu0 %v458, 126
        %v466 = vpop.permute.xlu0 %465
        %467 = vrot.lane.b32.xlu0 %v460, 126
        %v468 = vpop.permute.xlu0 %467
        %469 = vrot.lane.b32.xlu0 %v462, 126
        %v470 = vpop.permute.xlu0 %469
        %v471 = vsel %vm288, %v464, %v466
        %v472 = vsel %vm288, %v468, %v470
        %v475 = vadd.f32 %v438, %v471
        %v476 = vadd.f32 %v439, %v472
        %v477 = vmul.f32 %v475, 1.442695
        %v478 = vpow.pop %v477
        %v479 = vmul.f32 %v476, 1.442695
        %v480 = vpow.pop %v479
        %v481 = vsub.f32 %v478, 1e-06
        %v482 = vsub.f32 %v480, 1e-06
        %483 = vst [vmem:[%s183] sm:$0xff] %v481
        %484 = vst [vmem:[%s183 + $0x8] sm:$0xff] %v482
        %s485 = sand.u32 %s97, 1
        %s486 = scalar_lea.sflag [#allocation3], %s485
        %s487 = sand.u32 %s97, 1
        %s488 = smul.addr %s487, 16
        %s489 = scalar_lea.vmem [#allocation5], %s488
        // Predicated region
        $region33: #{tpu_custom_call.1} parent=27 // pred_check
          %p490 = pneg %p107
        $region34: #{tpu_custom_call.1} parent=27 // pred_check_branch
          %492 = sbr.rel (%p490) target = $region36
        $region35: #{tpu_custom_call.1} parent=27 // pred_region
          %s493 = smul.u32 2, %s24
          %s495 = ssub.s32 256, 256
          %496 = vsyncadd %s486, %s495
          %s497 = smul.addr %s23, 2
          %s498 = sadd.s32 %s493, %s497
          %s499 = smul.addr %s22, 8
          %s500 = sadd.s32 %s498, %s499
          %s501 = smul.addr %s500, 128
          %s502 = scalar_lea.hbm %s2, %s501
          %s503 = sshll.u32 %s489, 4
          %s504 = int_to_ptr.vmem [resolvable:$true] %s503
          %509 = dma.vmem_to_hbm [thread:$0]  %s504, 256, %s502, %s486, 128, 128, 8
        $region36: #{tpu_custom_call.1} parent=27 // pred_fallthru
          _
      $region28: #{tpu_custom_call.1} parent=5 // pred_fallthru
        _
      %p510 = scmp.le.s32.totalorder 2, %s12
      // Predicated region
      $region37: #{tpu_custom_call.1} parent=5 // pred_check
        %p511 = pneg %p510
      $region38: #{tpu_custom_call.1} parent=5 // pred_check_branch
        %513 = sbr.rel (%p511) target = $region40
      $region39: #{tpu_custom_call.1} parent=5 // pred_region
        %s514 = ssub.s32 %s12, 2
        // Predicated region
        $region41: #{tpu_custom_call.1} parent=39 // pred_check
          %p515 = pneg %p113
        $region42: #{tpu_custom_call.1} parent=39 // pred_check_branch
          %517 = sbr.rel (%p515) target = $region44
        $region43: #{tpu_custom_call.1} parent=39 // pred_region
          %s518 = sand.u32 %s98, 1
          %s519 = scalar_lea.sflag [#allocation3], %s518
          %s520 = sand.u32 %s98, 1
          %s521 = smul.addr %s520, 16
          %s522 = scalar_lea.vmem [#allocation5], %s521
          %523 = dma.done %s519, 256
        $region44: #{tpu_custom_call.1} parent=39 // pred_fallthru
          _
      $region40: #{tpu_custom_call.1} parent=5 // pred_fallthru
        _
    $region6: #{tpu_custom_call.1} parent=1 // loop_footer
      %s16 = sadd.s32 1, %s12
    $region7: #{tpu_custom_call.1} parent=1 // loop_footer_branch
      %11 = sbr.rel target = $region3
    $region8: #{tpu_custom_call.1} parent=1 // loop_exit
      _
    %524 = vsyncpa [#allocation3], 1
    %s525 = scalar_lea.sflag [#allocation3], 1
    %526 = vsyncpa %s525, 1
    %527 = vsyncpa [#allocation4], 1
    %s528 = scalar_lea.sflag [#allocation4], 1
    %529 = vsyncpa %s528, 1

</llo_original>
